<compile_context>
chip_gen: v7x
topology: tpu7x:2x2x1
jax: 0.10.0
libtpu: 0.0.40
codegen_flags: <defaults>
</compile_context>

<pallas_src>
import jax
import jax.numpy as jnp
from jax import lax
from jax.experimental import pallas as pl
from jax.experimental.pallas import tpu as pltpu


# ----------------------------- Pallas kernel --------------------------------

def _fused_conv_kernel(params_ref, x_ref, o_ref):
    """Fused conv1 -> conv2 -> (-50) -> ReLU for one batch element.

    params_ref : (COUT*(CIN+3),) SMEM, per output channel o:
                 [Wc[o,0..CIN-1], bc[o]-50, relu(bc[o]-50), relu(b2[o]-50)]
    x_ref      : (1, CIN, H, W)        VMEM (unpadded input)
    o_ref      : (1, COUT, H+6, W+6)   VMEM (NCHW output)
    """
    cin = x_ref.shape[1]
    cout = o_ref.shape[1]
    hp, wp = o_ref.shape[2], o_ref.shape[3]
    stride = cin + 3

    # Hoist the (H, W) input planes out of the output-channel loop.
    xs = [x_ref[0, i] for i in range(cin)]

    for o in range(cout):
        base = o * stride
        bc_m50 = params_ref[base + cin]        # bc - 50
        ring_val = params_ref[base + cin + 1]  # relu(bc - 50)
        outer_val = params_ref[base + cin + 2] # relu(b2 - 50)

        # Interior: relu(Wc @ x + bc - 50), unrolled VPU FMAs (K=3, too small for MXU).
        acc = params_ref[base + 0] * xs[0] + bc_m50
        for i in range(1, cin):
            acc = acc + params_ref[base + i] * xs[i]
        inner = jnp.maximum(acc, 0.0)

        # Region writes: whole plane = outer-ring constant, inner rectangle =
        # 1-px ring constant, then the interior result. No iota/select.
        o_ref[0, o] = jnp.broadcast_to(outer_val, (hp, wp)).astype(o_ref.dtype)
        o_ref[0, o, 2:hp - 2, 2:wp - 2] = jnp.broadcast_to(
            ring_val, (hp - 4, wp - 4)).astype(o_ref.dtype)
        o_ref[0, o, 3:hp - 3, 3:wp - 3] = inner.astype(o_ref.dtype)


# ------------------------------- Wrapper -------------------------------------

def _prep_params(w1, b1, w2, b2):
    """Composite weights / biases, packed per output channel for SMEM."""
    cmid, cin = w1.shape[0], w1.shape[1]
    cout = w2.shape[0]
    w1m = w1.reshape(cmid, cin).astype(jnp.float32)
    w2m = w2.reshape(cout, cmid).astype(jnp.float32)
    b1f = b1.astype(jnp.float32)
    b2f = b2.astype(jnp.float32)
    wc = w2m @ w1m                         # (COUT, CIN)
    bc = w2m @ b1f + b2f                   # (COUT,)
    packed = jnp.concatenate(
        [wc,
         (bc - 50.0)[:, None],
         jnp.maximum(bc - 50.0, 0.0)[:, None],
         jnp.maximum(b2f - 50.0, 0.0)[:, None]],
        axis=1)
    return packed.reshape(cout * (cin + 3))


@jax.jit
def model_forward(x, w1, b1, w2, b2):
    """x: (N, 3, H, W) float32 NCHW.  Returns (N, 2, H+6, W+6) float32 NCHW."""
    n, cin, h, w = x.shape
    cout = w2.shape[0]
    hp, wp = h + 6, w + 6                   # conv1 pad 1 + conv2 pad 2 per side

    params = _prep_params(w1, b1, w2, b2)   # one tiny SMEM vector

    return pl.pallas_call(
        _fused_conv_kernel,
        out_shape=jax.ShapeDtypeStruct((n, cout, hp, wp), jnp.float32),
        grid=(n,),
        in_specs=[
            pl.BlockSpec(memory_space=pltpu.MemorySpace.SMEM),
            pl.BlockSpec((1, cin, h, w), lambda b: (b, 0, 0, 0)),
        ],
        out_specs=pl.BlockSpec((1, cout, hp, wp), lambda b: (b, 0, 0, 0)),
        compiler_params=pltpu.CompilerParams(
            dimension_semantics=("parallel",)),
    )(params, x.astype(jnp.float32))


# ------------------------- Pure-JAX reference --------------------------------

@jax.jit
def reference_forward(x, w1, b1, w2, b2):
    dn = ("NCHW", "OIHW", "NCHW")
    v1 = lax.conv_general_dilated(
        x, w1, window_strides=(1, 1), padding=((1, 1), (1, 1)),
        dimension_numbers=dn,
    ) + b1.reshape(1, -1, 1, 1)
    v2 = lax.conv_general_dilated(
        v1, w2, window_strides=(1, 1), padding=((2, 2), (2, 2)),
        rhs_dilation=(2, 2), dimension_numbers=dn,
    ) + b2.reshape(1, -1, 1, 1)
    return jnp.maximum(v2 - 50.0, 0.0)


# --------------------------------- Main ---------------------------------------

if __name__ == "__main__":
    key = jax.random.PRNGKey(0)
    kx, k1, k2, k3, k4 = jax.random.split(key, 5)

    # Input shape matches the PyTorch script: (1, 3, 40, 60).
    x = jax.random.normal(kx, (1, 3, 40, 60), dtype=jnp.float32) * 2.0

    # Deterministic parameter init (shapes from the module __init__). conv2's
    # bias is centered near 50 so relu(v2 - 50) mixes zeros and positives,
    # giving a non-trivial correctness check.
    w1 = jax.random.normal(k1, (6, 3, 1, 1), dtype=jnp.float32)
    b1 = jax.random.normal(k2, (6,), dtype=jnp.float32)
    w2 = jax.random.normal(k3, (2, 6, 1, 1), dtype=jnp.float32)
    b2 = jax.random.normal(k4, (2,), dtype=jnp.float32) * 5.0 + 50.0

    out = jax.block_until_ready(model_forward(x, w1, b1, w2, b2))
    ref = jax.block_until_ready(reference_forward(x, w1, b1, w2, b2))

    assert out.shape == (1, 2, 46, 66), out.shape
    max_err = float(jnp.max(jnp.abs(out - ref)))
    assert jnp.allclose(out, ref, atol=5e-4, rtol=1e-4), max_err
    print("KERNEL_OK")
</pallas_src>

<mosaic_0001>
module attributes {stable_mosaic.version = 11 : i64} {
  func.func @_fused_conv_kernel(%arg0: i32, %arg1: memref<12xf32, #tpu.memory_space<smem>>, %arg2: memref<1x3x40x60xf32, #tpu.memory_space<vmem>>, %arg3: memref<1x2x46x66xf32, #tpu.memory_space<vmem>>) attributes {dimension_semantics = [#tpu.dimension_semantics<parallel>], iteration_bounds = array<i64: 1>, scalar_prefetch = 0 : i64, scratch_operands = 0 : i64, tpu.core_type = #tpu.core_type<tc>, window_params = [{transform_indices = @transform_0, window_bounds = array<i64: 12>}, {transform_indices = @transform_1, window_bounds = array<i64: 1, 3, 40, 60>}, {transform_indices = @transform_2, window_bounds = array<i64: 1, 2, 46, 66>}]} {
    %c0 = arith.constant 0 : index
    %c0_0 = arith.constant 0 : index
    %c0_1 = arith.constant 0 : index
    %c0_2 = arith.constant 0 : index
    %0 = vector.load %arg2[%c0, %c0_0, %c0_1, %c0_2] : memref<1x3x40x60xf32, #tpu.memory_space<vmem>>, vector<1x1x40x60xf32>
    %1 = vector.shape_cast %0 : vector<1x1x40x60xf32> to vector<40x60xf32>
    %c0_3 = arith.constant 0 : index
    %c1 = arith.constant 1 : index
    %c0_4 = arith.constant 0 : index
    %c0_5 = arith.constant 0 : index
    %2 = vector.load %arg2[%c0_3, %c1, %c0_4, %c0_5] : memref<1x3x40x60xf32, #tpu.memory_space<vmem>>, vector<1x1x40x60xf32>
    %3 = vector.shape_cast %2 : vector<1x1x40x60xf32> to vector<40x60xf32>
    %c0_6 = arith.constant 0 : index
    %c2 = arith.constant 2 : index
    %c0_7 = arith.constant 0 : index
    %c0_8 = arith.constant 0 : index
    %4 = vector.load %arg2[%c0_6, %c2, %c0_7, %c0_8] : memref<1x3x40x60xf32, #tpu.memory_space<vmem>>, vector<1x1x40x60xf32>
    %5 = vector.shape_cast %4 : vector<1x1x40x60xf32> to vector<40x60xf32>
    %c3 = arith.constant 3 : index
    %6 = memref.load %arg1[%c3] : memref<12xf32, #tpu.memory_space<smem>>
    %c4 = arith.constant 4 : index
    %7 = memref.load %arg1[%c4] : memref<12xf32, #tpu.memory_space<smem>>
    %c5 = arith.constant 5 : index
    %8 = memref.load %arg1[%c5] : memref<12xf32, #tpu.memory_space<smem>>
    %c0_9 = arith.constant 0 : index
    %9 = memref.load %arg1[%c0_9] : memref<12xf32, #tpu.memory_space<smem>>
    %10 = vector.broadcast %9 : f32 to vector<40x60xf32>
    %11 = arith.mulf %10, %1 : vector<40x60xf32>
    %12 = vector.broadcast %6 : f32 to vector<40x60xf32>
    %13 = arith.addf %11, %12 : vector<40x60xf32>
    %c1_10 = arith.constant 1 : index
    %14 = memref.load %arg1[%c1_10] : memref<12xf32, #tpu.memory_space<smem>>
    %15 = vector.broadcast %14 : f32 to vector<40x60xf32>
    %16 = arith.mulf %15, %3 : vector<40x60xf32>
    %17 = arith.addf %13, %16 : vector<40x60xf32>
    %c2_11 = arith.constant 2 : index
    %18 = memref.load %arg1[%c2_11] : memref<12xf32, #tpu.memory_space<smem>>
    %19 = vector.broadcast %18 : f32 to vector<40x60xf32>
    %20 = arith.mulf %19, %5 : vector<40x60xf32>
    %21 = arith.addf %17, %20 : vector<40x60xf32>
    %cst = arith.constant 0.000000e+00 : f32
    %22 = vector.broadcast %cst : f32 to vector<40x60xf32>
    %23 = arith.maximumf %21, %22 : vector<40x60xf32>
    %24 = vector.broadcast %8 : f32 to vector<46x66xf32>
    %c0_12 = arith.constant 0 : index
    %c0_13 = arith.constant 0 : index
    %c0_14 = arith.constant 0 : index
    %c0_15 = arith.constant 0 : index
    %25 = vector.load %arg3[%c0_12, %c0_13, %c0_14, %c0_15] : memref<1x2x46x66xf32, #tpu.memory_space<vmem>>, vector<1x1x46x66xf32>
    %26 = vector.shape_cast %25 : vector<1x1x46x66xf32> to vector<46x66xf32>
    %27 = vector.shape_cast %24 : vector<46x66xf32> to vector<1x1x46x66xf32>
    tpu.vector_store %arg3[%c0_12, %c0_13, %c0_14, %c0_15], %27 {strides = array<i32>} : memref<1x2x46x66xf32, #tpu.memory_space<vmem>>, vector<1x1x46x66xf32>,
    %28 = vector.broadcast %7 : f32 to vector<42x62xf32>
    %c0_16 = arith.constant 0 : index
    %c0_17 = arith.constant 0 : index
    %c2_18 = arith.constant 2 : index
    %c2_19 = arith.constant 2 : index
    %29 = vector.load %arg3[%c0_16, %c0_17, %c2_18, %c2_19] : memref<1x2x46x66xf32, #tpu.memory_space<vmem>>, vector<1x1x42x62xf32>
    %30 = vector.shape_cast %29 : vector<1x1x42x62xf32> to vector<42x62xf32>
    %31 = vector.shape_cast %28 : vector<42x62xf32> to vector<1x1x42x62xf32>
    tpu.vector_store %arg3[%c0_16, %c0_17, %c2_18, %c2_19], %31 {strides = array<i32>} : memref<1x2x46x66xf32, #tpu.memory_space<vmem>>, vector<1x1x42x62xf32>,
    %c0_20 = arith.constant 0 : index
    %c0_21 = arith.constant 0 : index
    %c3_22 = arith.constant 3 : index
    %c3_23 = arith.constant 3 : index
    %32 = vector.load %arg3[%c0_20, %c0_21, %c3_22, %c3_23] : memref<1x2x46x66xf32, #tpu.memory_space<vmem>>, vector<1x1x40x60xf32>
    %33 = vector.shape_cast %32 : vector<1x1x40x60xf32> to vector<40x60xf32>
    %34 = vector.shape_cast %23 : vector<40x60xf32> to vector<1x1x40x60xf32>
    tpu.vector_store %arg3[%c0_20, %c0_21, %c3_22, %c3_23], %34 {strides = array<i32>} : memref<1x2x46x66xf32, #tpu.memory_space<vmem>>, vector<1x1x40x60xf32>,
    %c9 = arith.constant 9 : index
    %35 = memref.load %arg1[%c9] : memref<12xf32, #tpu.memory_space<smem>>
    %c10 = arith.constant 10 : index
    %36 = memref.load %arg1[%c10] : memref<12xf32, #tpu.memory_space<smem>>
    %c11 = arith.constant 11 : index
    %37 = memref.load %arg1[%c11] : memref<12xf32, #tpu.memory_space<smem>>
    %c6 = arith.constant 6 : index
    %38 = memref.load %arg1[%c6] : memref<12xf32, #tpu.memory_space<smem>>
    %39 = vector.broadcast %38 : f32 to vector<40x60xf32>
    %40 = arith.mulf %39, %1 : vector<40x60xf32>
    %41 = vector.broadcast %35 : f32 to vector<40x60xf32>
    %42 = arith.addf %40, %41 : vector<40x60xf32>
    %c7 = arith.constant 7 : index
    %43 = memref.load %arg1[%c7] : memref<12xf32, #tpu.memory_space<smem>>
    %44 = vector.broadcast %43 : f32 to vector<40x60xf32>
    %45 = arith.mulf %44, %3 : vector<40x60xf32>
    %46 = arith.addf %42, %45 : vector<40x60xf32>
    %c8 = arith.constant 8 : index
    %47 = memref.load %arg1[%c8] : memref<12xf32, #tpu.memory_space<smem>>
    %48 = vector.broadcast %47 : f32 to vector<40x60xf32>
    %49 = arith.mulf %48, %5 : vector<40x60xf32>
    %50 = arith.addf %46, %49 : vector<40x60xf32>
    %cst_24 = arith.constant 0.000000e+00 : f32
    %51 = vector.broadcast %cst_24 : f32 to vector<40x60xf32>
    %52 = arith.maximumf %50, %51 : vector<40x60xf32>
    %53 = vector.broadcast %37 : f32 to vector<46x66xf32>
    %c0_25 = arith.constant 0 : index
    %c1_26 = arith.constant 1 : index
    %c0_27 = arith.constant 0 : index
    %c0_28 = arith.constant 0 : index
    %54 = vector.load %arg3[%c0_25, %c1_26, %c0_27, %c0_28] : memref<1x2x46x66xf32, #tpu.memory_space<vmem>>, vector<1x1x46x66xf32>
    %55 = vector.shape_cast %54 : vector<1x1x46x66xf32> to vector<46x66xf32>
    %56 = vector.shape_cast %53 : vector<46x66xf32> to vector<1x1x46x66xf32>
    tpu.vector_store %arg3[%c0_25, %c1_26, %c0_27, %c0_28], %56 {strides = array<i32>} : memref<1x2x46x66xf32, #tpu.memory_space<vmem>>, vector<1x1x46x66xf32>,
    %57 = vector.broadcast %36 : f32 to vector<42x62xf32>
    %c0_29 = arith.constant 0 : index
    %c1_30 = arith.constant 1 : index
    %c2_31 = arith.constant 2 : index
    %c2_32 = arith.constant 2 : index
    %58 = vector.load %arg3[%c0_29, %c1_30, %c2_31, %c2_32] : memref<1x2x46x66xf32, #tpu.memory_space<vmem>>, vector<1x1x42x62xf32>
    %59 = vector.shape_cast %58 : vector<1x1x42x62xf32> to vector<42x62xf32>
    %60 = vector.shape_cast %57 : vector<42x62xf32> to vector<1x1x42x62xf32>
    tpu.vector_store %arg3[%c0_29, %c1_30, %c2_31, %c2_32], %60 {strides = array<i32>} : memref<1x2x46x66xf32, #tpu.memory_space<vmem>>, vector<1x1x42x62xf32>,
    %c0_33 = arith.constant 0 : index
    %c1_34 = arith.constant 1 : index
    %c3_35 = arith.constant 3 : index
    %c3_36 = arith.constant 3 : index
    %61 = vector.load %arg3[%c0_33, %c1_34, %c3_35, %c3_36] : memref<1x2x46x66xf32, #tpu.memory_space<vmem>>, vector<1x1x40x60xf32>
    %62 = vector.shape_cast %61 : vector<1x1x40x60xf32> to vector<40x60xf32>
    %63 = vector.shape_cast %52 : vector<40x60xf32> to vector<1x1x40x60xf32>
    tpu.vector_store %arg3[%c0_33, %c1_34, %c3_35, %c3_36], %63 {strides = array<i32>} : memref<1x2x46x66xf32, #tpu.memory_space<vmem>>, vector<1x1x40x60xf32>,
    return
  }
  func.func @transform_0(%arg0: i32) -> i32 {
    %c0_i32 = arith.constant 0 : i32
    %c0_i32_0 = arith.constant 0 : i32
    return %c0_i32 : i32
  }
  func.func @transform_1(%arg0: i32) -> (i32, i32, i32, i32) {
    %c0_i32 = arith.constant 0 : i32
    %c0_i32_0 = arith.constant 0 : i32
    %c0_i32_1 = arith.constant 0 : i32
    %c0_i32_2 = arith.constant 0 : i32
    return %arg0, %c0_i32, %c0_i32_0, %c0_i32_1 : i32, i32, i32, i32
  }
  func.func @transform_2(%arg0: i32) -> (i32, i32, i32, i32) {
    %c0_i32 = arith.constant 0 : i32
    %c0_i32_0 = arith.constant 0 : i32
    %c0_i32_1 = arith.constant 0 : i32
    %c0_i32_2 = arith.constant 0 : i32
    return %arg0, %c0_i32, %c0_i32_0, %c0_i32_1 : i32, i32, i32, i32
  }
}

</mosaic_0001>

<llo_original>
// kernel: model_forward.1
$region0: #{model_forward.1}
  #allocation0 [shape = 'u32[]', space=smem, size = 0x4, offset = 0x4, fixed_abs, tag = 'smem constant byte address 0x4 - core index']
  #allocation1 [shape = 'u32[144,128]{1,0:T(1,128)}', space=vmem, size = 0x12000, scoped, tag = 'internal scratch']
  %s0 = inlined_call_operand.vmem [shape: f32[12], index: 0, kind: input, shape index: {}]
  %s1 = inlined_call_operand.hbm [shape: f32[1,3,40,60], index: 1, kind: input, shape index: {}]
  %s2 = inlined_call_operand.vmem [shape: f32[1,2,46,66], index: 2, kind: output, shape index: {}]
  %s3 = sld [smem:[#allocation0]]
  $region26: #{model_forward.1} parent=0
    _
  %s5 = ssub.s32 1, %s3
  %s6 = scalar_select 0, %s5, %s3
  $region1: #{model_forward.1} parent=0
    #allocation2 [shape = 'u8[512]{0}', space=smem, size = 0x200, scoped, tag = 'input window, operand 0, single buffered']
    #allocation3 [shape = 's32[1]{0}', space=sflag, size = 0x4, scoped, tag = 'scoped memory for model_forward.1']
    #allocation4 [shape = 's32[1]{0}', space=sflag, size = 0x4, scoped, tag = 'scoped memory for model_forward.1']
    #allocation5 [shape = 'u8[61440]{0}', space=vmem, size = 0xf000, scoped, tag = 'input window, operand 1, single buffered']
    %7 = vsyncpa [#allocation4], 0
    %8 = vsyncpa [#allocation3], 0
    // Predicated region
    $region2: #{model_forward.1} parent=1 // pred_check
      _
    $region3: #{model_forward.1} parent=1 // pred_check_branch
      %10 = sbr.rel (0) target = $region5
    $region4: #{model_forward.1} parent=1 // pred_region
      %s12 = ssub.s32 16, 16
      %13 = vsyncadd [#allocation4], %s12
      %s15 = sshll.u32 %s0, 4
      %s16 = int_to_ptr.vmem [resolvable:$true] %s15
      %18 = dma.vmem_to_smem %s16, 16, [#allocation2], [#allocation4]
    $region5: #{model_forward.1} parent=1 // pred_fallthru
      _
    // Predicated region
    $region6: #{model_forward.1} parent=1 // pred_check
      _
    $region7: #{model_forward.1} parent=1 // pred_check_branch
      %20 = sbr.rel (0) target = $region9
    $region8: #{model_forward.1} parent=1 // pred_region
      %s22 = ssub.s32 1920, 1920
      %23 = vsyncadd [#allocation3], %s22
      %s24 = sshll.u32 [#allocation5], 4
      %s25 = int_to_ptr.vmem [resolvable:$true] %s24
      %30 = dma.hbm_to_vmem [thread:$0]  %s1, 1920, %s25, [#allocation3], 128, 128, 8
    $region9: #{model_forward.1} parent=1 // pred_fallthru
      _
    // Predicated region
    $region10: #{model_forward.1} parent=1 // pred_check
      _
    $region11: #{model_forward.1} parent=1 // pred_check_branch
      %32 = sbr.rel (0) target = $region13
    $region12: #{model_forward.1} parent=1 // pred_region
      %33 = dma.done [#allocation4], 16
    $region13: #{model_forward.1} parent=1 // pred_fallthru
      _
    // Predicated region
    $region14: #{model_forward.1} parent=1 // pred_check
      _
    $region15: #{model_forward.1} parent=1 // pred_check_branch
      %35 = sbr.rel (0) target = $region17
    $region16: #{model_forward.1} parent=1 // pred_region
      %36 = dma.done [#allocation3], 1920
    $region17: #{model_forward.1} parent=1 // pred_fallthru
      _
    %37 = sfence
    %v38 = vld [vmem:[#allocation5] sm:$0xff]
    %v39 = vld [vmem:[#allocation5 + $0x8] sm:$0xff]
    %v40 = vld [vmem:[#allocation5 + $0x10] sm:$0xff]
    %v41 = vld [vmem:[#allocation5 + $0x18] sm:$0xff]
    %v42 = vld [vmem:[#allocation5 + $0x20] sm:$0xff]
    %s43 = scalar_lea.vmem [#allocation5], 40
    %v44 = vld [vmem:[%s43] sm:$0xff]
    %v45 = vld [vmem:[%s43 + $0x8] sm:$0xff]
    %v46 = vld [vmem:[%s43 + $0x10] sm:$0xff]
    %v47 = vld [vmem:[%s43 + $0x18] sm:$0xff]
    %v48 = vld [vmem:[%s43 + $0x20] sm:$0xff]
    %s49 = scalar_lea.vmem [#allocation5], 80
    %v50 = vld [vmem:[%s49] sm:$0xff]
    %v51 = vld [vmem:[%s49 + $0x8] sm:$0xff]
    %v52 = vld [vmem:[%s49 + $0x10] sm:$0xff]
    %v53 = vld [vmem:[%s49 + $0x18] sm:$0xff]
    %v54 = vld [vmem:[%s49 + $0x20] sm:$0xff]
    %s55 = sld [smem:[#allocation2 + $0x3]]
    %s56 = sld [smem:[#allocation2 + $0x4]]
    %s57 = sld [smem:[#allocation2 + $0x5]]
    %s58 = sld [smem:[#allocation2]]
    %v59 = vstv %s58
    %v60 = vmul.f32 %v59, %v38
    %v61 = vmul.f32 %v59, %v39
    %v62 = vmul.f32 %v59, %v40
    %v63 = vmul.f32 %v59, %v41
    %v64 = vmul.f32 %v59, %v42
    %v65 = vstv %s55
    %v66 = vadd.f32 %v60, %v65
    %v67 = vadd.f32 %v61, %v65
    %v68 = vadd.f32 %v62, %v65
    %v69 = vadd.f32 %v63, %v65
    %v70 = vadd.f32 %v64, %v65
    %s71 = sld [smem:[#allocation2 + $0x1]]
    %v72 = vstv %s71
    %v73 = vmul.f32 %v72, %v44
    %v74 = vmul.f32 %v72, %v45
    %v75 = vmul.f32 %v72, %v46
    %v76 = vmul.f32 %v72, %v47
    %v77 = vmul.f32 %v72, %v48
    %v78 = vadd.f32 %v66, %v73
    %v79 = vadd.f32 %v67, %v74
    %v80 = vadd.f32 %v68, %v75
    %v81 = vadd.f32 %v69, %v76
    %v82 = vadd.f32 %v70, %v77
    %s83 = sld [smem:[#allocation2 + $0x2]]
    %v84 = vstv %s83
    %v85 = vmul.f32 %v84, %v50
    %v86 = vmul.f32 %v84, %v51
    %v87 = vmul.f32 %v84, %v52
    %v88 = vmul.f32 %v84, %v53
    %v89 = vmul.f32 %v84, %v54
    %v90 = vadd.f32 %v78, %v85
    %v91 = vadd.f32 %v79, %v86
    %v92 = vadd.f32 %v80, %v87
    %v93 = vadd.f32 %v81, %v88
    %v94 = vadd.f32 %v82, %v89
    %v95 = vmax.f32 %v90, 0.0
    %v96 = vmax.f32 %v91, 0.0
    %v97 = vmax.f32 %v92, 0.0
    %v98 = vmax.f32 %v93, 0.0
    %v99 = vmax.f32 %v94, 0.0
    %v100 = vstv %s57
    %vm101 = vcmask 539648
    %102 = vst.msk [vmem:[%s2] sm:$0xff] %vm101, %v100
    %103 = vst.msk [vmem:[%s2 + $0x8] sm:$0xff] %vm101, %v100
    %104 = vst.msk [vmem:[%s2 + $0x10] sm:$0xff] %vm101, %v100
    %105 = vst.msk [vmem:[%s2 + $0x18] sm:$0xff] %vm101, %v100
    %106 = vst.msk [vmem:[%s2 + $0x20] sm:$0xff] %vm101, %v100
    %vm107 = vcmask 537600
    %108 = vst.msk [vmem:[%s2 + $0x28] sm:$0x3f] %vm107, %v100
    %v109 = vstv %s56
    %vm110 = vcmask 523280
    %111 = vst.msk [vmem:[%s2 + $0x2] sm:$0xff] %vm110, %v109
    %112 = vst.msk [vmem:[%s2 + $0xa] sm:$0xff] %vm110, %v109
    %113 = vst.msk [vmem:[%s2 + $0x12] sm:$0xff] %vm110, %v109
    %114 = vst.msk [vmem:[%s2 + $0x1a] sm:$0xff] %vm110, %v109
    %115 = vst.msk [vmem:[%s2 + $0x22] sm:$0xff] %vm110, %v109
    %vm116 = vcmask 517136
    %117 = vst.msk [vmem:[%s2 + $0x2a] sm:$0x3] %vm116, %v109
    %123 = vrot.lane.b32.xlu0 %v95, 3
    %v124 = vpop.permute.xlu0 %123
    %125 = vrot.lane.b32.xlu0 %v96, 3
    %v126 = vpop.permute.xlu0 %125
    %127 = vrot.lane.b32.xlu0 %v97, 3
    %v128 = vpop.permute.xlu0 %127
    %129 = vrot.lane.b32.xlu0 %v98, 3
    %v130 = vpop.permute.xlu0 %129
    %131 = vrot.lane.b32.xlu0 %v99, 3
    %v132 = vpop.permute.xlu0 %131
    %vm138 = vcmask 515096
    %139 = vst.msk [vmem:[%s2 + $0x3] sm:$0xff] %vm138, %v124
    %140 = vst.msk [vmem:[%s2 + $0xb] sm:$0xff] %vm138, %v126
    %141 = vst.msk [vmem:[%s2 + $0x13] sm:$0xff] %vm138, %v128
    %142 = vst.msk [vmem:[%s2 + $0x1b] sm:$0xff] %vm138, %v130
    %143 = vst.msk [vmem:[%s2 + $0x23] sm:$0xff] %vm138, %v132
    %s144 = sld [smem:[#allocation2 + $0x9]]
    %s145 = sld [smem:[#allocation2 + $0xa]]
    %s146 = sld [smem:[#allocation2 + $0xb]]
    %s147 = sld [smem:[#allocation2 + $0x6]]
    %v148 = vstv %s147
    %v149 = vmul.f32 %v148, %v38
    %v150 = vmul.f32 %v148, %v39
    %v151 = vmul.f32 %v148, %v40
    %v152 = vmul.f32 %v148, %v41
    %v153 = vmul.f32 %v148, %v42
    %v154 = vstv %s144
    %v155 = vadd.f32 %v149, %v154
    %v156 = vadd.f32 %v150, %v154
    %v157 = vadd.f32 %v151, %v154
    %v158 = vadd.f32 %v152, %v154
    %v159 = vadd.f32 %v153, %v154
    %s160 = sld [smem:[#allocation2 + $0x7]]
    %v161 = vstv %s160
    %v162 = vmul.f32 %v161, %v44
    %v163 = vmul.f32 %v161, %v45
    %v164 = vmul.f32 %v161, %v46
    %v165 = vmul.f32 %v161, %v47
    %v166 = vmul.f32 %v161, %v48
    %v167 = vadd.f32 %v155, %v162
    %v168 = vadd.f32 %v156, %v163
    %v169 = vadd.f32 %v157, %v164
    %v170 = vadd.f32 %v158, %v165
    %v171 = vadd.f32 %v159, %v166
    %s172 = sld [smem:[#allocation2 + $0x8]]
    %v173 = vstv %s172
    %v174 = vmul.f32 %v173, %v50
    %v175 = vmul.f32 %v173, %v51
    %v176 = vmul.f32 %v173, %v52
    %v177 = vmul.f32 %v173, %v53
    %v178 = vmul.f32 %v173, %v54
    %v179 = vadd.f32 %v167, %v174
    %v180 = vadd.f32 %v168, %v175
    %v181 = vadd.f32 %v169, %v176
    %v182 = vadd.f32 %v170, %v177
    %v183 = vadd.f32 %v171, %v178
    %v184 = vmax.f32 %v179, 0.0
    %v185 = vmax.f32 %v180, 0.0
    %v186 = vmax.f32 %v181, 0.0
    %v187 = vmax.f32 %v182, 0.0
    %v188 = vmax.f32 %v183, 0.0
    %v189 = vstv %s146
    %s190 = scalar_lea.vmem %s2, 48
    %191 = vst.msk [vmem:[%s190] sm:$0xff] %vm101, %v189
    %192 = vst.msk [vmem:[%s190 + $0x8] sm:$0xff] %vm101, %v189
    %193 = vst.msk [vmem:[%s190 + $0x10] sm:$0xff] %vm101, %v189
    %194 = vst.msk [vmem:[%s190 + $0x18] sm:$0xff] %vm101, %v189
    %195 = vst.msk [vmem:[%s190 + $0x20] sm:$0xff] %vm101, %v189
    %196 = vst.msk [vmem:[%s190 + $0x28] sm:$0x3f] %vm107, %v189
    %v197 = vstv %s145
    %198 = vst.msk [vmem:[%s190 + $0x2] sm:$0xff] %vm110, %v197
    %199 = vst.msk [vmem:[%s190 + $0xa] sm:$0xff] %vm110, %v197
    %200 = vst.msk [vmem:[%s190 + $0x12] sm:$0xff] %vm110, %v197
    %201 = vst.msk [vmem:[%s190 + $0x1a] sm:$0xff] %vm110, %v197
    %202 = vst.msk [vmem:[%s190 + $0x22] sm:$0xff] %vm110, %v197
    %203 = vst.msk [vmem:[%s190 + $0x2a] sm:$0x3] %vm116, %v197
    %209 = vrot.lane.b32.xlu0 %v184, 3
    %v210 = vpop.permute.xlu0 %209
    %211 = vrot.lane.b32.xlu0 %v185, 3
    %v212 = vpop.permute.xlu0 %211
    %213 = vrot.lane.b32.xlu0 %v186, 3
    %v214 = vpop.permute.xlu0 %213
    %215 = vrot.lane.b32.xlu0 %v187, 3
    %v216 = vpop.permute.xlu0 %215
    %217 = vrot.lane.b32.xlu0 %v188, 3
    %v218 = vpop.permute.xlu0 %217
    %224 = vst.msk [vmem:[%s190 + $0x3] sm:$0xff] %vm138, %v210
    %225 = vst.msk [vmem:[%s190 + $0xb] sm:$0xff] %vm138, %v212
    %226 = vst.msk [vmem:[%s190 + $0x13] sm:$0xff] %vm138, %v214
    %227 = vst.msk [vmem:[%s190 + $0x1b] sm:$0xff] %vm138, %v216
    %228 = vst.msk [vmem:[%s190 + $0x23] sm:$0xff] %vm138, %v218
    // Predicated region
    $region18: #{model_forward.1} parent=1 // pred_check
      _
    $region19: #{model_forward.1} parent=1 // pred_check_branch
      %230 = sbr.rel (0) target = $region21
    $region20: #{model_forward.1} parent=1 // pred_region
      _
    $region21: #{model_forward.1} parent=1 // pred_fallthru
      _
    // Predicated region
    $region22: #{model_forward.1} parent=1 // pred_check
      _
    $region23: #{model_forward.1} parent=1 // pred_check_branch
      %232 = sbr.rel (0) target = $region25
    $region24: #{model_forward.1} parent=1 // pred_region
      _
    $region25: #{model_forward.1} parent=1 // pred_fallthru
      _
    %233 = vsyncpa [#allocation3], 1
    %234 = vsyncpa [#allocation4], 1

</llo_original>
